<compile_context>
chip_gen: v6e
topology: v6e:2x2x1
jax: 0.10.0
libtpu: 0.0.40
codegen_flags: <defaults>
</compile_context>

<pallas_src>
import functools

import jax
import jax.numpy as jnp
from jax.experimental import pallas as pl
from jax.experimental.pallas import tpu as pltpu


def _physical_vmem_bytes():
    """Per-TensorCore VMEM capacity; conservative fallback if the query fails."""
    try:
        cap = int(getattr(pltpu.get_tpu_info(), "vmem_capacity_bytes", 0))
        if cap > 0:
            return cap
    except Exception:
        pass
    return 64 * 1024 * 1024  # smallest current generation (v7x per-TC)


def _round_up(x, m):
    return -(-x // m) * m


def _rmsnorm_kernel(x_ref, w_ref, o_ref, *, eps):
    # x_ref: (tile_rows, hidden), w_ref: (1, hidden), o_ref: (tile_rows, hidden)
    x = x_ref[...].astype(jnp.float32)
    var = jnp.mean(x * x, axis=-1, keepdims=True)
    normed = x * jax.lax.rsqrt(var + eps)
    if x_ref.dtype != jnp.float32:
        # torch casts the normalized activations back to the input dtype before
        # the weight multiply -- keep that rounding for low-precision inputs.
        normed = normed.astype(x_ref.dtype)
    out_dt = o_ref.dtype
    o_ref[...] = w_ref[...].astype(out_dt) * normed.astype(out_dt)


def deepseek_v2_rmsnorm(hidden_states, weight, *, eps=1e-6, tile_rows=None,
                        out_dtype=None, vmem_budget_bytes=None):
    """hidden_states: (..., hidden), weight: (hidden,).

    Default output dtype = promote(weight.dtype, hidden_states.dtype), matching
    `weight * hidden_states.to(input_dtype)` in the torch module; pass
    `out_dtype=` to opt into a narrower writeback (halves output HBM traffic).
    """
    orig_shape = hidden_states.shape
    hidden = orig_shape[-1]
    x2d = hidden_states.reshape(-1, hidden)
    rows = x2d.shape[0]
    w2d = weight.reshape(1, hidden)

    if out_dtype is None:
        out_dtype = jnp.promote_types(weight.dtype, hidden_states.dtype)
    out_dtype = jnp.dtype(out_dtype)

    in_bytes = jnp.dtype(hidden_states.dtype).itemsize
    out_bytes = out_dtype.itemsize
    # Sublane packing: 8 rows for 32-bit, 16 for 16-bit, 32 for 8-bit dtypes.
    align = max(8, 8 * (4 // in_bytes), 8 * (4 // out_bytes))

    phys_vmem = _physical_vmem_bytes()
    if vmem_budget_bytes is None:
        # Budget for the kernel's *total* VMEM footprint (blocks + fp32 temps):
        # <=60% of physical VMEM, capped at 48 MiB (v7x: ~38 MiB, v5e/v6e: 48 MiB).
        vmem_budget_bytes = min(int(phys_vmem * 0.6), 48 * 1024 * 1024)

    # Bytes of VMEM per tile row: double-buffered input block, double-buffered
    # output block, and ~3 fp32 temporaries (x, x*x, normed) the compiler keeps.
    per_row = hidden * (2 * in_bytes + 2 * out_bytes + 3 * 4)

    if tile_rows is None:
        tile_rows = max(align, vmem_budget_bytes // per_row)
        # Keep >= ~4 grid steps when rows allow: grid=(1,) has zero pipelining
        # and leaves one of v7x's two TensorCores idle.
        min_steps = 4
        pipelined_cap = _round_up(-(-rows // min_steps), align)
        tile_rows = min(tile_rows, pipelined_cap, 16384)
        tile_rows = max(align, (tile_rows // align) * align)
    if tile_rows >= rows:
        tile_rows = rows  # full-extent block is always legal

    grid = (pl.cdiv(rows, tile_rows),)  # partial last block handled by Pallas

    # Explicit scoped-VMEM limit covering blocks + temporaries (+4 MiB headroom),
    # clamped to physical capacity; never below 32 MiB so small tiles still get
    # the generous default behaviour.
    footprint = tile_rows * per_row + 4 * hidden * 4  # + resident weight buffers
    vmem_limit = int(min(phys_vmem, max(footprint + (4 << 20), 32 << 20)))

    out = pl.pallas_call(
        functools.partial(_rmsnorm_kernel, eps=eps),
        out_shape=jax.ShapeDtypeStruct((rows, hidden), out_dtype),
        grid_spec=pltpu.PrefetchScalarGridSpec(
            num_scalar_prefetch=0,
            grid=grid,
            in_specs=[
                pl.BlockSpec((tile_rows, hidden), lambda i: (i, 0)),
                pl.BlockSpec((1, hidden), lambda i: (0, 0)),  # weight stays resident
            ],
            out_specs=pl.BlockSpec((tile_rows, hidden), lambda i: (i, 0)),
        ),
        compiler_params=pltpu.CompilerParams(
            # "parallel" shards the row axis across v7x's two TensorCores; if an
            # xprof trace shows a single core taking every step, switch to
            # pltpu.CORE_PARALLEL (no-op on single-TC v5e/v6e).
            dimension_semantics=("parallel",),
            vmem_limit_bytes=vmem_limit,
        ),
    )(x2d, w2d)

    return out.reshape(orig_shape)


def rmsnorm_reference(x, weight, eps=1e-6):
    x32 = x.astype(jnp.float32)
    var = jnp.mean(x32 * x32, axis=-1, keepdims=True)
    normed = (x32 * jax.lax.rsqrt(var + eps)).astype(x.dtype)
    out_dt = jnp.promote_types(weight.dtype, x.dtype)
    return weight.astype(out_dt) * normed.astype(out_dt)


if __name__ == "__main__":
    key = jax.random.PRNGKey(0)
    k1, k2 = jax.random.split(key)

    # Case 1: fp32 activations, hidden=128 (module init: weight = ones(hidden)).
    batch, seq, hidden = 2, 8, 128
    x = jax.random.normal(k1, (batch, seq, hidden), dtype=jnp.float32)
    w = jnp.ones((hidden,), dtype=jnp.float32)
    out = jax.block_until_ready(deepseek_v2_rmsnorm(x, w))
    ref = rmsnorm_reference(x, w)
    assert out.shape == x.shape, (out.shape, x.shape)
    assert out.dtype == ref.dtype, (out.dtype, ref.dtype)
    assert jnp.allclose(out, ref, atol=1e-5, rtol=1e-5), "fp32 mismatch vs reference"

    # Case 2: bf16 activations / fp32 weight, rows (40) not a multiple of the
    # bf16-aligned tile -> exercises auto-sizing, multi-step grid, partial block.
    batch2, seq2, hidden2 = 5, 8, 256
    xb = jax.random.normal(k2, (batch2, seq2, hidden2),
                           dtype=jnp.float32).astype(jnp.bfloat16)
    wb = jnp.full((hidden2,), 1.5, dtype=jnp.float32)
    out2 = jax.block_until_ready(deepseek_v2_rmsnorm(xb, wb))
    ref2 = rmsnorm_reference(xb, wb)
    assert out2.shape == xb.shape, (out2.shape, xb.shape)
    assert out2.dtype == jnp.float32, out2.dtype  # fp32 weight promotes output
    assert jnp.allclose(out2, ref2, atol=2e-2, rtol=2e-2), "bf16 mismatch vs reference"

    # Case 3: same inputs with out_dtype override -> bf16 writeback path.
    out3 = jax.block_until_ready(deepseek_v2_rmsnorm(xb, wb, out_dtype=jnp.bfloat16))
    assert out3.dtype == jnp.bfloat16, out3.dtype
    assert jnp.allclose(out3.astype(jnp.float32), ref2, atol=3e-2, rtol=3e-2), \
        "bf16-out mismatch vs reference"

    print("KERNEL_OK")
</pallas_src>

<mosaic_0001>
module attributes {stable_mosaic.version = 11 : i64} {
  func.func @_rmsnorm_kernel(%arg0: i32, %arg1: memref<8x128xf32, #tpu.memory_space<vmem>>, %arg2: memref<1x128xf32, #tpu.memory_space<vmem>>, %arg3: memref<8x128xf32, #tpu.memory_space<vmem>>) attributes {dimension_semantics = [#tpu.dimension_semantics<parallel>], iteration_bounds = array<i64: 2>, scalar_prefetch = 0 : i64, scratch_operands = 0 : i64, tpu.core_type = #tpu.core_type<tc>, window_params = [{transform_indices = @transform_0, window_bounds = array<i64: 8, 128>}, {pipeline_mode = #tpu.pipeline_mode<synchronous>, transform_indices = @transform_1, window_bounds = array<i64: 1, 128>}, {transform_indices = @transform_2, window_bounds = array<i64: 8, 128>}]} {
    %c0 = arith.constant 0 : index
    %c0_0 = arith.constant 0 : index
    %0 = vector.load %arg1[%c0, %c0_0] : memref<8x128xf32, #tpu.memory_space<vmem>>, vector<8x128xf32>
    %1 = arith.mulf %0, %0 : vector<8x128xf32>
    %cst = arith.constant dense<0.000000e+00> : vector<8xf32>
    %2 = vector.multi_reduction <add>, %1, %cst [1] : vector<8x128xf32> to vector<8xf32>
    %3 = vector.shape_cast %2 : vector<8xf32> to vector<8x1xf32>
    %cst_1 = arith.constant 1.280000e+02 : f32
    %4 = vector.broadcast %cst_1 : f32 to vector<8x1xf32>
    %5 = arith.divf %3, %4 : vector<8x1xf32>
    %cst_2 = arith.constant 9.99999997E-7 : f32
    %6 = vector.broadcast %cst_2 : f32 to vector<8x1xf32>
    %7 = arith.addf %5, %6 : vector<8x1xf32>
    %8 = math.rsqrt %7 : vector<8x1xf32>
    %9 = vector.broadcast %8 : vector<8x1xf32> to vector<8x128xf32>
    %10 = arith.mulf %0, %9 : vector<8x128xf32>
    %c0_3 = arith.constant 0 : index
    %c0_4 = arith.constant 0 : index
    %11 = vector.load %arg2[%c0_3, %c0_4] : memref<1x128xf32, #tpu.memory_space<vmem>>, vector<1x128xf32>
    %12 = vector.broadcast %11 : vector<1x128xf32> to vector<8x128xf32>
    %13 = arith.mulf %12, %10 : vector<8x128xf32>
    %c0_5 = arith.constant 0 : index
    %c0_6 = arith.constant 0 : index
    %14 = vector.load %arg3[%c0_5, %c0_6] : memref<8x128xf32, #tpu.memory_space<vmem>>, vector<8x128xf32>
    tpu.vector_store %arg3[%c0_5, %c0_6], %13 {strides = array<i32>} : memref<8x128xf32, #tpu.memory_space<vmem>>, vector<8x128xf32>,
    return
  }
  func.func @transform_0(%arg0: i32) -> (i32, i32) {
    %c0_i32 = arith.constant 0 : i32
    %c0_i32_0 = arith.constant 0 : i32
    return %arg0, %c0_i32 : i32, i32
  }
  func.func @transform_1(%arg0: i32) -> (i32, i32) {
    %c0_i32 = arith.constant 0 : i32
    %c0_i32_0 = arith.constant 0 : i32
    %c0_i32_1 = arith.constant 0 : i32
    return %c0_i32, %c0_i32_0 : i32, i32
  }
  func.func @transform_2(%arg0: i32) -> (i32, i32) {
    %c0_i32 = arith.constant 0 : i32
    %c0_i32_0 = arith.constant 0 : i32
    return %arg0, %c0_i32 : i32, i32
  }
}

</mosaic_0001>

<llo_original>
// kernel: tpu_custom_call.1
$region0: #{tpu_custom_call.1}
  #allocation0 [shape = 'u32[]', space=smem, size = 0x4, offset = 0x4, fixed_abs, tag = 'smem constant byte address 0x4 - core index']
  #allocation1 [shape = 'u32[144,128]{1,0:T(1,128)}', space=vmem, size = 0x12000, scoped, tag = 'internal scratch']
  %s0 = inlined_call_operand.hbm [shape: f32[16,128], index: 0, kind: input, shape index: {}]
  %s1 = inlined_call_operand.vmem [shape: f32[1,128], index: 1, kind: input, shape index: {}]
  %s2 = inlined_call_operand.hbm [shape: f32[16,128], index: 2, kind: output, shape index: {}]
  %s3 = sld [smem:[#allocation0]]
  $region45: #{tpu_custom_call.1} parent=0
    _
  %s5 = ssub.s32 1, %s3
  %s6 = scalar_select 0, %s5, %s3
  $region1: #{tpu_custom_call.1} parent=0
    #allocation2 [shape = 'u8[8192]{0}', space=vmem, size = 0x2000, scoped, tag = 'input window, operand 0']
    #allocation3 [shape = 's32[2]{0}', space=sflag, size = 0x8, scoped, tag = 'scoped memory for tpu_custom_call.1']
    #allocation4 [shape = 's32[2]{0}', space=sflag, size = 0x8, scoped, tag = 'scoped memory for tpu_custom_call.1']
    #allocation5 [shape = 'u8[8192]{0}', space=vmem, size = 0x2000, scoped, tag = 'output window, operand 0']
    %7 = vsyncpa [#allocation3], 0
    %s8 = scalar_lea.sflag [#allocation3], 1
    %9 = vsyncpa %s8, 0
    %10 = vsyncpa [#allocation4], 0
    %s11 = scalar_lea.sflag [#allocation4], 1
    %12 = vsyncpa %s11, 0
    loop: start=0, step=1, limit=4
    $region2: #{tpu_custom_call.1} parent=1 // loop_pre_header
      _
    $region3: #{tpu_custom_call.1} parent=1 // loop_header
      %s14 = sphi 0, %s18
      %p15 = scmp.ge.s32.totalorder %s14, 4
      %s24 = sphi 0, %s26
      %s27 = sphi 0, %s24
      %s28 = sphi 0, %s27
      %s44 = sphi 0, %s28
      %s48 = sphi 0, %s48
      %s50 = sphi 0, %s48
      %s51 = sphi 0, %s50
      %s65 = sphi 0, %s51
      %s71 = sphi 0, %s73
      %s74 = sphi 0, %s71
      %s75 = sphi 0, %s74
      %s91 = sphi 0, %s75
    $region4: #{tpu_custom_call.1} parent=1 // loop_header_branch
      %17 = sbr.rel (%p15) target = $region8
    $region5: #{tpu_custom_call.1} parent=1 // loop_body
      %s19 = ssub.s32 %s14, 1
      %s20 = ssub.s32 %s14, 2
      %s21 = sadd.s32 %s14, 1
      %s22 = ssub.s32 %s14, %s21
      %p23 = scmp.eq.s32.totalorder %s22, 0
      %s25 = sadd.s32 %s24, 1
      %s26 = scalar_select %p23, %s24, %s25
      %p29 = pneg %p23
      %p30 = scmp.eq.s32.totalorder %s14, 1
      %p31 = por %p29, %p30
      %p32 = scmp.ne.s32.totalorder %s24, %s27
      %p33 = scmp.eq.s32.totalorder %s14, 0
      %p34 = por %p32, %p33
      %p35 = scmp.ne.s32.totalorder %s24, %s27
      %p36 = scmp.eq.s32.totalorder %s19, 1
      %p37 = por %p35, %p36
      %p38 = scmp.ne.s32.totalorder %s27, %s28
      %p39 = scmp.eq.s32.totalorder %s19, 0
      %p40 = por %p38, %p39
      %p41 = scmp.ne.s32.totalorder %s27, %s28
      %p42 = scmp.eq.s32.totalorder %s20, 1
      %p43 = por %p41, %p42
      %p45 = scmp.ne.s32.totalorder %s28, %s44
      %p46 = scmp.eq.s32.totalorder %s20, 0
      %p47 = por %p45, %p46
      %s49 = sadd.s32 %s48, 1
      %p52 = scmp.eq.s32.totalorder %s14, 1
      %p53 = scmp.ne.s32.totalorder %s48, %s50
      %p54 = scmp.eq.s32.totalorder %s14, 0
      %p55 = por %p53, %p54
      %p56 = scmp.ne.s32.totalorder %s48, %s50
      %p57 = scmp.eq.s32.totalorder %s19, 1
      %p58 = por %p56, %p57
      %p59 = scmp.ne.s32.totalorder %s50, %s51
      %p60 = scmp.eq.s32.totalorder %s19, 0
      %p61 = por %p59, %p60
      %p62 = scmp.ne.s32.totalorder %s50, %s51
      %p63 = scmp.eq.s32.totalorder %s20, 1
      %p64 = por %p62, %p63
      %p66 = scmp.ne.s32.totalorder %s51, %s65
      %p67 = scmp.eq.s32.totalorder %s20, 0
      %p68 = por %p66, %p67
      %s69 = ssub.s32 %s14, %s21
      %p70 = scmp.eq.s32.totalorder %s69, 0
      %s72 = sadd.s32 %s71, 1
      %s73 = scalar_select %p70, %s71, %s72
      %p76 = pneg %p70
      %p77 = scmp.eq.s32.totalorder %s14, 1
      %p78 = por %p76, %p77
      %p79 = scmp.ne.s32.totalorder %s71, %s74
      %p80 = scmp.eq.s32.totalorder %s14, 0
      %p81 = por %p79, %p80
      %p82 = scmp.ne.s32.totalorder %s71, %s74
      %p83 = scmp.eq.s32.totalorder %s19, 1
      %p84 = por %p82, %p83
      %p85 = scmp.ne.s32.totalorder %s74, %s75
      %p86 = scmp.eq.s32.totalorder %s19, 0
      %p87 = por %p85, %p86
      %p88 = scmp.ne.s32.totalorder %s74, %s75
      %p89 = scmp.eq.s32.totalorder %s20, 1
      %p90 = por %p88, %p89
      %p92 = scmp.ne.s32.totalorder %s75, %s91
      %p93 = scmp.eq.s32.totalorder %s20, 0
      %p94 = por %p92, %p93
      %p95 = scmp.le.s32.totalorder 1, %s14
      %p96 = scmp.lt.s32.totalorder %s14, 3
      %p97 = pnand %p95, %p96
      %p98 = pneg %p97
      // Predicated region
      $region9: #{tpu_custom_call.1} parent=5 // pred_check
        _
      $region10: #{tpu_custom_call.1} parent=5 // pred_check_branch
        %100 = sbr.rel (%p97) target = $region12
      $region11: #{tpu_custom_call.1} parent=5 // pred_region
        %s101 = ssub.s32 %s14, 1
        // Predicated region
        $region13: #{tpu_custom_call.1} parent=11 // pred_check
          %p102 = pneg %p61
        $region14: #{tpu_custom_call.1} parent=11 // pred_check_branch
          %104 = sbr.rel (%p102) target = $region16
        $region15: #{tpu_custom_call.1} parent=11 // pred_region
          _
        $region16: #{tpu_custom_call.1} parent=11 // pred_fallthru
          _
      $region12: #{tpu_custom_call.1} parent=5 // pred_fallthru
        _
      %p105 = scmp.lt.s32.totalorder %s14, 2
      // Predicated region
      $region17: #{tpu_custom_call.1} parent=5 // pred_check
        %p106 = pneg %p105
      $region18: #{tpu_custom_call.1} parent=5 // pred_check_branch
        %108 = sbr.rel (%p106) target = $region20
      $region19: #{tpu_custom_call.1} parent=5 // pred_region
        // Predicated region
        $region21: #{tpu_custom_call.1} parent=19 // pred_check
          %p109 = pneg %p34
        $region22: #{tpu_custom_call.1} parent=19 // pred_check_branch
          %111 = sbr.rel (%p109) target = $region24
        $region23: #{tpu_custom_call.1} parent=19 // pred_region
          %s112 = sand.u32 %s24, 1
          %s113 = scalar_lea.sflag [#allocation3], %s112
          %s114 = sand.u32 %s24, 1
          %s115 = smul.addr %s114, 8
          %s116 = scalar_lea.vmem [#allocation2], %s115
          %s118 = ssub.s32 128, 128
          %119 = vsyncadd %s113, %s118
          %s120 = smul.addr %s14, 128
          %s121 = scalar_lea.hbm %s0, %s120
          %s123 = sshll.u32 %s116, 4
          %s124 = int_to_ptr.vmem [resolvable:$true] %s123
          %126 = dma.hbm_to_vmem [thread:$0]  %s121, 128, %s124, %s113
        $region24: #{tpu_custom_call.1} parent=19 // pred_fallthru
          _
      $region20: #{tpu_custom_call.1} parent=5 // pred_fallthru
        _
      %p127 = scmp.le.s32.totalorder 1, %s14
      %p128 = scmp.lt.s32.totalorder %s14, 3
      %p129 = pnand %p127, %p128
      %p130 = pneg %p129
      // Predicated region
      $region25: #{tpu_custom_call.1} parent=5 // pred_check
        _
      $region26: #{tpu_custom_call.1} parent=5 // pred_check_branch
        %132 = sbr.rel (%p129) target = $region28
      $region27: #{tpu_custom_call.1} parent=5 // pred_region
        %s133 = ssub.s32 %s14, 1
        %s134 = sand.u32 %s27, 1
        %s135 = scalar_lea.sflag [#allocation3], %s134
        %s136 = sand.u32 %s27, 1
        %s137 = smul.addr %s136, 8
        %s138 = scalar_lea.vmem [#allocation2], %s137
        // Predicated region
        $region29: #{tpu_custom_call.1} parent=27 // pred_check
          %p139 = pneg %p40
        $region30: #{tpu_custom_call.1} parent=27 // pred_check_branch
          %141 = sbr.rel (%p139) target = $region32
        $region31: #{tpu_custom_call.1} parent=27 // pred_region
          %142 = dma.done %s135, 128
        $region32: #{tpu_custom_call.1} parent=27 // pred_fallthru
          _
        %s143 = sand.u32 %s27, 1
        %s144 = scalar_lea.sflag [#allocation3], %s143
        %s145 = sand.u32 %s27, 1
        %s146 = smul.addr %s145, 8
        %s147 = scalar_lea.vmem [#allocation2], %s146
        %p148 = pneg %p40
        %p149 = pneg %p37
        %p150 = pneg %p61
        %p151 = pneg %p58
        %p152 = pneg %p87
        %p153 = pneg %p84
        %s154 = sand.u32 %s74, 1
        %s155 = scalar_lea.sflag [#allocation4], %s154
        %s156 = sand.u32 %s74, 1
        %s157 = smul.addr %s156, 8
        %s158 = scalar_lea.vmem [#allocation5], %s157
        %v159 = vld [vmem:[%s138] sm:$0xff]
        %v160 = vmul.f32 %v159, %v159
        %161 = vadd.xlane.f32.xlu0 %v160
        %v162 = vpop.xlane.xlu0 %161
        %v163 = vrcp.pop 128.0
        %v164 = vmul.f32 %v162, %v163
        %v165 = vadd.f32 %v164, 1e-06
        %v166 = vrsqrt.pop %v165
        %v167 = vmul.f32 %v159, %v166
        %v168 = vld [vmem:[%s1] sm:$0x1]
        %v170 = vlaneseq
        %v171 = vshrl.u32 %v170, 7
        %v172 = vsub.s32 0, %v171
        %v173 = vrot.slane %v168, %v172
        %v175 = vmul.f32 %v173, %v167
        %176 = vst [vmem:[%s158] sm:$0xff] %v175
        %s177 = sand.u32 %s74, 1
        %s178 = scalar_lea.sflag [#allocation4], %s177
        %s179 = sand.u32 %s74, 1
        %s180 = smul.addr %s179, 8
        %s181 = scalar_lea.vmem [#allocation5], %s180
        // Predicated region
        $region33: #{tpu_custom_call.1} parent=27 // pred_check
          %p182 = pneg %p84
        $region34: #{tpu_custom_call.1} parent=27 // pred_check_branch
          %184 = sbr.rel (%p182) target = $region36
        $region35: #{tpu_custom_call.1} parent=27 // pred_region
          %s186 = ssub.s32 128, 128
          %187 = vsyncadd %s178, %s186
          %s188 = smul.addr %s19, 128
          %s189 = scalar_lea.hbm %s2, %s188
          %s191 = sshll.u32 %s181, 4
          %s192 = int_to_ptr.vmem [resolvable:$true] %s191
          %194 = dma.vmem_to_hbm [thread:$0]  %s192, 128, %s189, %s178
        $region36: #{tpu_custom_call.1} parent=27 // pred_fallthru
          _
      $region28: #{tpu_custom_call.1} parent=5 // pred_fallthru
        _
      %p195 = scmp.le.s32.totalorder 2, %s14
      // Predicated region
      $region37: #{tpu_custom_call.1} parent=5 // pred_check
        %p196 = pneg %p195
      $region38: #{tpu_custom_call.1} parent=5 // pred_check_branch
        %198 = sbr.rel (%p196) target = $region40
      $region39: #{tpu_custom_call.1} parent=5 // pred_region
        %s199 = ssub.s32 %s14, 2
        // Predicated region
        $region41: #{tpu_custom_call.1} parent=39 // pred_check
          %p200 = pneg %p90
        $region42: #{tpu_custom_call.1} parent=39 // pred_check_branch
          %202 = sbr.rel (%p200) target = $region44
        $region43: #{tpu_custom_call.1} parent=39 // pred_region
          %s203 = sand.u32 %s75, 1
          %s204 = scalar_lea.sflag [#allocation4], %s203
          %s205 = sand.u32 %s75, 1
          %s206 = smul.addr %s205, 8
          %s207 = scalar_lea.vmem [#allocation5], %s206
          %208 = dma.done %s204, 128
        $region44: #{tpu_custom_call.1} parent=39 // pred_fallthru
          _
      $region40: #{tpu_custom_call.1} parent=5 // pred_fallthru
        _
    $region6: #{tpu_custom_call.1} parent=1 // loop_footer
      %s18 = sadd.s32 1, %s14
    $region7: #{tpu_custom_call.1} parent=1 // loop_footer_branch
      %13 = sbr.rel target = $region3
    $region8: #{tpu_custom_call.1} parent=1 // loop_exit
      _
    %209 = vsyncpa [#allocation3], 1
    %s210 = scalar_lea.sflag [#allocation3], 1
    %211 = vsyncpa %s210, 1
    %212 = vsyncpa [#allocation4], 1
    %s213 = scalar_lea.sflag [#allocation4], 1
    %214 = vsyncpa %s213, 1

</llo_original>
